<compile_context>
chip_gen: v7x
topology: tpu7x:2x2x1
jax: 0.10.0
libtpu: 0.0.40
codegen_flags: <defaults>
</compile_context>

<pallas_src>
import functools

import jax
import jax.numpy as jnp
from jax.experimental import pallas as pl
from jax.experimental.pallas import tpu as pltpu


def _partial_conv_kernel(x_ref, m_ref, *refs, kernel_size, with_new_mask):
    """refs = (out_ref[, new_mask_ref], ap_scratch, hp_scratch)."""
    if with_new_mask:
        out_ref, nm_ref, ap_ref, hp_ref = refs
    else:
        out_ref, ap_ref, hp_ref = refs
        nm_ref = None

    k = kernel_size
    p = k // 2
    _, C, H, W = x_ref.shape

    x = x_ref[0]              # (C, H, W)
    m = m_ref[0]              # (1, H, W)
    xm = x * m                # input * mask (mask broadcast over channels)

    # ---- stage a W-padded, (C+1)-channel block [input*mask ; mask] in VMEM ----
    # Zero halo is built here in scratch (no HBM-side padding pass).
    ap_ref[...] = jnp.zeros_like(ap_ref)
    ap_ref[:C, :, p:p + W] = xm
    ap_ref[C:, :, p:p + W] = m
    ap = ap_ref[...]          # (C+1, H, W + 2p)

    # ---- horizontal pass: k shifted adds along W (separable box filter) ----
    hs = ap[:, :, 0:W]
    for dx in range(1, k):
        hs = hs + ap[:, :, dx:dx + W]

    # ---- stage H-padded horizontal sums, then vertical pass along H ----
    hp_ref[...] = jnp.zeros_like(hp_ref)
    hp_ref[:, p:p + H, :] = hs
    hp = hp_ref[...]          # (C+1, H + 2p, W)

    box = hp[:, 0:H, :]
    for dy in range(1, k):
        box = box + hp[:, dy:dy + H, :]

    conv_out = box[:C] * (1.0 / float(k * k))   # == input_conv(input * mask)
    mask_out = box[C:]                          # == mask_conv(mask), (1, H, W)

    holes = mask_out == 0.0                     # no_update_holes
    denom = jnp.where(holes, 1.0, mask_out)
    # Division via the EUP approximate reciprocal (otherwise-idle unit).
    mask_ratio = float(k * k) * pl.reciprocal(denom, approx=True)

    out = conv_out * mask_ratio
    out = jnp.where(holes, 0.0, out)
    out = xm + out * (1.0 - m)                  # input*mask + output*(1-mask)

    out_ref[0] = out.astype(out_ref.dtype)
    if nm_ref is not None:
        nm_ref[0] = jnp.where(holes, 0.0, 1.0).astype(nm_ref.dtype)


def partial_conv(x, mask, kernel_size=3, return_new_mask=False):
    """x: (N, 3, H, W) float32, mask: (N, 1, H, W) float32 (0/1 valued)."""
    assert kernel_size in (3, 5, 7)
    N, C, H, W = x.shape
    assert mask.shape == (N, 1, H, W)
    p = kernel_size // 2

    kernel = functools.partial(
        _partial_conv_kernel, kernel_size=kernel_size,
        with_new_mask=return_new_mask)

    out_block = pl.BlockSpec((1, C, H, W), lambda n: (n, 0, 0, 0))
    if return_new_mask:
        out_shape = (jax.ShapeDtypeStruct((N, C, H, W), x.dtype),
                     jax.ShapeDtypeStruct((N, 1, H, W), mask.dtype))
        out_specs = [out_block,
                     pl.BlockSpec((1, 1, H, W), lambda n: (n, 0, 0, 0))]
    else:
        # No second output at all when new_mask is not requested: saves the
        # N x 1 x H x W HBM writeback in this memory-bound kernel.
        out_shape = jax.ShapeDtypeStruct((N, C, H, W), x.dtype)
        out_specs = out_block

    # NOTE: for very large images (e.g. >= 1024x1024 f32) the whole-image block
    # plus scratches should be tiled along H (with a p-row halo) to fit v7x's
    # 64 MiB VMEM; whole-image blocks are fine at typical sizes.
    result = pl.pallas_call(
        kernel,
        out_shape=out_shape,
        grid_spec=pltpu.PrefetchScalarGridSpec(
            num_scalar_prefetch=0,
            grid=(N,),
            in_specs=[
                pl.BlockSpec((1, C, H, W), lambda n: (n, 0, 0, 0)),
                pl.BlockSpec((1, 1, H, W), lambda n: (n, 0, 0, 0)),
            ],
            out_specs=out_specs,
            scratch_shapes=[
                pltpu.VMEM((C + 1, H, W + 2 * p), jnp.float32),   # W-padded stage
                pltpu.VMEM((C + 1, H + 2 * p, W), jnp.float32),   # H-padded stage
            ],
        ),
        compiler_params=pltpu.CompilerParams(
            dimension_semantics=("parallel",),
            vmem_limit_bytes=32 * 1024 * 1024,
        ),
    )(x, mask)
    return result


def _reference(x, mask, kernel_size=3):
    """Pure-JAX reference matching the PyTorch forward exactly."""
    k = kernel_size
    p = k // 2
    w_in = jnp.zeros((3, 3, k, k), jnp.float32)
    for i in range(3):
        w_in = w_in.at[i, i].set(1.0 / (k * k))   # input_conv weights
    w_mask = jnp.ones((1, 1, k, k), jnp.float32)  # mask_conv weights
    dn = ("NCHW", "OIHW", "NCHW")

    def conv(a, w):
        return jax.lax.conv_general_dilated(
            a, w, window_strides=(1, 1), padding=[(p, p), (p, p)],
            dimension_numbers=dn)

    out = conv(x * mask, w_in)
    mask_out = conv(mask, w_mask)
    holes = mask_out == 0.0
    ratio = (k * k) / jnp.where(holes, 1.0, mask_out)
    out = out * ratio
    out = jnp.where(holes, 0.0, out)
    out = x * mask + out * (1.0 - mask)
    new_mask = jnp.where(holes, 0.0, 1.0)
    return out, new_mask


if __name__ == "__main__":
    key = jax.random.PRNGKey(0)
    kx, km = jax.random.split(key)

    # C=3 is fixed by the module (input_conv: 3->3). W=128 keeps the lane
    # dimension dense (full vregs, unmasked vector stores) while staying small.
    N, C, H, W = 2, 3, 16, 128
    x = jax.random.normal(kx, (N, C, H, W), dtype=jnp.float32)
    mask = (jax.random.uniform(km, (N, 1, H, W)) > 0.6).astype(jnp.float32)

    # Tolerance: the kernel uses the EUP approximate reciprocal (~2^-12 relative
    # error) for the mask-ratio divide; exact divide matches to 1e-5.
    tol = dict(rtol=2e-3, atol=2e-3)

    for ks in (3, 5):
        ref_out, ref_new_mask = _reference(x, mask, kernel_size=ks)

        out, new_mask = partial_conv(x, mask, kernel_size=ks, return_new_mask=True)
        out = jax.block_until_ready(out)
        new_mask = jax.block_until_ready(new_mask)
        assert out.shape == (N, C, H, W) and new_mask.shape == (N, 1, H, W)
        assert jnp.allclose(out, ref_out, **tol), f"output mismatch (k={ks})"
        assert jnp.allclose(new_mask, ref_new_mask), f"new_mask mismatch (k={ks})"

        out_only = jax.block_until_ready(
            partial_conv(x, mask, kernel_size=ks, return_new_mask=False))
        assert jnp.allclose(out_only, ref_out, **tol), f"output-only mismatch (k={ks})"

    print("KERNEL_OK")
</pallas_src>

<mosaic_0001>
module attributes {stable_mosaic.version = 11 : i64} {
  func.func @_partial_conv_kernel(%arg0: i32, %arg1: memref<1x3x16x128xf32, #tpu.memory_space<vmem>>, %arg2: memref<1x1x16x128xf32, #tpu.memory_space<vmem>>, %arg3: memref<1x3x16x128xf32, #tpu.memory_space<vmem>>, %arg4: memref<1x1x16x128xf32, #tpu.memory_space<vmem>>, %arg5: memref<4x16x130xf32, #tpu.memory_space<vmem>>, %arg6: memref<4x18x128xf32, #tpu.memory_space<vmem>>) attributes {dimension_semantics = [#tpu.dimension_semantics<parallel>], iteration_bounds = array<i64: 2>, scalar_prefetch = 0 : i64, scratch_operands = 2 : i64, tpu.core_type = #tpu.core_type<tc>, window_params = [{transform_indices = @transform_0, window_bounds = array<i64: 1, 3, 16, 128>}, {transform_indices = @transform_1, window_bounds = array<i64: 1, 1, 16, 128>}, {transform_indices = @transform_2, window_bounds = array<i64: 1, 3, 16, 128>}, {transform_indices = @transform_3, window_bounds = array<i64: 1, 1, 16, 128>}]} {
    %c0 = arith.constant 0 : index
    %c0_0 = arith.constant 0 : index
    %c0_1 = arith.constant 0 : index
    %c0_2 = arith.constant 0 : index
    %0 = vector.load %arg1[%c0, %c0_0, %c0_1, %c0_2] : memref<1x3x16x128xf32, #tpu.memory_space<vmem>>, vector<1x3x16x128xf32>
    %1 = vector.shape_cast %0 : vector<1x3x16x128xf32> to vector<3x16x128xf32>
    %c0_3 = arith.constant 0 : index
    %c0_4 = arith.constant 0 : index
    %c0_5 = arith.constant 0 : index
    %c0_6 = arith.constant 0 : index
    %2 = vector.load %arg2[%c0_3, %c0_4, %c0_5, %c0_6] : memref<1x1x16x128xf32, #tpu.memory_space<vmem>>, vector<1x1x16x128xf32>
    %3 = vector.shape_cast %2 : vector<1x1x16x128xf32> to vector<1x16x128xf32>
    %4 = vector.broadcast %3 : vector<1x16x128xf32> to vector<3x16x128xf32>
    %5 = arith.mulf %1, %4 : vector<3x16x128xf32>
    %cst = arith.constant 0.000000e+00 : f32
    %6 = vector.broadcast %cst : f32 to vector<4x16x130xf32>
    %c0_7 = arith.constant 0 : index
    %c0_8 = arith.constant 0 : index
    %c0_9 = arith.constant 0 : index
    %7 = vector.load %arg5[%c0_7, %c0_8, %c0_9] : memref<4x16x130xf32, #tpu.memory_space<vmem>>, vector<4x16x130xf32>
    tpu.vector_store %arg5[%c0_7, %c0_8, %c0_9], %6 {strides = array<i32>} : memref<4x16x130xf32, #tpu.memory_space<vmem>>, vector<4x16x130xf32>,
    %c0_10 = arith.constant 0 : index
    %c0_11 = arith.constant 0 : index
    %c1 = arith.constant 1 : index
    %8 = vector.load %arg5[%c0_10, %c0_11, %c1] : memref<4x16x130xf32, #tpu.memory_space<vmem>>, vector<3x16x128xf32>
    tpu.vector_store %arg5[%c0_10, %c0_11, %c1], %5 {strides = array<i32>} : memref<4x16x130xf32, #tpu.memory_space<vmem>>, vector<3x16x128xf32>,
    %c3 = arith.constant 3 : index
    %c0_12 = arith.constant 0 : index
    %c1_13 = arith.constant 1 : index
    %9 = vector.load %arg5[%c3, %c0_12, %c1_13] : memref<4x16x130xf32, #tpu.memory_space<vmem>>, vector<1x16x128xf32>
    tpu.vector_store %arg5[%c3, %c0_12, %c1_13], %3 {strides = array<i32>} : memref<4x16x130xf32, #tpu.memory_space<vmem>>, vector<1x16x128xf32>,
    %c0_14 = arith.constant 0 : index
    %c0_15 = arith.constant 0 : index
    %c0_16 = arith.constant 0 : index
    %10 = vector.load %arg5[%c0_14, %c0_15, %c0_16] : memref<4x16x130xf32, #tpu.memory_space<vmem>>, vector<4x16x130xf32>
    %11 = vector.extract_strided_slice %10 {offsets = [0, 0, 0], sizes = [4, 16, 128], strides = [1, 1, 1]} : vector<4x16x130xf32> to vector<4x16x128xf32>
    %12 = vector.extract_strided_slice %10 {offsets = [0, 0, 1], sizes = [4, 16, 128], strides = [1, 1, 1]} : vector<4x16x130xf32> to vector<4x16x128xf32>
    %13 = arith.addf %11, %12 : vector<4x16x128xf32>
    %14 = vector.extract_strided_slice %10 {offsets = [0, 0, 2], sizes = [4, 16, 128], strides = [1, 1, 1]} : vector<4x16x130xf32> to vector<4x16x128xf32>
    %15 = arith.addf %13, %14 : vector<4x16x128xf32>
    %cst_17 = arith.constant 0.000000e+00 : f32
    %16 = vector.broadcast %cst_17 : f32 to vector<4x18x128xf32>
    %c0_18 = arith.constant 0 : index
    %c0_19 = arith.constant 0 : index
    %c0_20 = arith.constant 0 : index
    %17 = vector.load %arg6[%c0_18, %c0_19, %c0_20] : memref<4x18x128xf32, #tpu.memory_space<vmem>>, vector<4x18x128xf32>
    tpu.vector_store %arg6[%c0_18, %c0_19, %c0_20], %16 {strides = array<i32>} : memref<4x18x128xf32, #tpu.memory_space<vmem>>, vector<4x18x128xf32>,
    %c0_21 = arith.constant 0 : index
    %c1_22 = arith.constant 1 : index
    %c0_23 = arith.constant 0 : index
    %18 = vector.load %arg6[%c0_21, %c1_22, %c0_23] : memref<4x18x128xf32, #tpu.memory_space<vmem>>, vector<4x16x128xf32>
    tpu.vector_store %arg6[%c0_21, %c1_22, %c0_23], %15 {strides = array<i32>} : memref<4x18x128xf32, #tpu.memory_space<vmem>>, vector<4x16x128xf32>,
    %c0_24 = arith.constant 0 : index
    %c0_25 = arith.constant 0 : index
    %c0_26 = arith.constant 0 : index
    %19 = vector.load %arg6[%c0_24, %c0_25, %c0_26] : memref<4x18x128xf32, #tpu.memory_space<vmem>>, vector<4x18x128xf32>
    %20 = vector.extract_strided_slice %19 {offsets = [0, 0, 0], sizes = [4, 16, 128], strides = [1, 1, 1]} : vector<4x18x128xf32> to vector<4x16x128xf32>
    %21 = vector.extract_strided_slice %19 {offsets = [0, 1, 0], sizes = [4, 16, 128], strides = [1, 1, 1]} : vector<4x18x128xf32> to vector<4x16x128xf32>
    %22 = arith.addf %20, %21 : vector<4x16x128xf32>
    %23 = vector.extract_strided_slice %19 {offsets = [0, 2, 0], sizes = [4, 16, 128], strides = [1, 1, 1]} : vector<4x18x128xf32> to vector<4x16x128xf32>
    %24 = arith.addf %22, %23 : vector<4x16x128xf32>
    %25 = vector.extract_strided_slice %24 {offsets = [0, 0, 0], sizes = [3, 16, 128], strides = [1, 1, 1]} : vector<4x16x128xf32> to vector<3x16x128xf32>
    %cst_27 = arith.constant 0.111111112 : f32
    %26 = vector.broadcast %cst_27 : f32 to vector<3x16x128xf32>
    %27 = arith.mulf %25, %26 : vector<3x16x128xf32>
    %28 = vector.extract_strided_slice %24 {offsets = [3, 0, 0], sizes = [1, 16, 128], strides = [1, 1, 1]} : vector<4x16x128xf32> to vector<1x16x128xf32>
    %cst_28 = arith.constant 0.000000e+00 : f32
    %29 = vector.broadcast %cst_28 : f32 to vector<1x16x128xf32>
    %30 = arith.cmpf oeq, %28, %29 : vector<1x16x128xf32>
    %cst_29 = arith.constant 1.000000e+00 : f32
    %31 = vector.broadcast %cst_29 : f32 to vector<1x16x128xf32>
    %32 = arith.select %30, %31, %28 : vector<1x16x128xi1>, vector<1x16x128xf32>
    %33 = tpu.reciprocal %32 {approx = true} : vector<1x16x128xf32> -> vector<1x16x128xf32>
    %cst_30 = arith.constant 9.000000e+00 : f32
    %34 = vector.broadcast %cst_30 : f32 to vector<1x16x128xf32>
    %35 = arith.mulf %34, %33 : vector<1x16x128xf32>
    %36 = vector.broadcast %35 : vector<1x16x128xf32> to vector<3x16x128xf32>
    %37 = arith.mulf %27, %36 : vector<3x16x128xf32>
    %cst_31 = arith.constant 0.000000e+00 : f32
    %38 = vector.shape_cast %30 : vector<1x16x128xi1> to vector<1x16x128xi1>
    %39 = vector.broadcast %38 : vector<1x16x128xi1> to vector<3x16x128xi1>
    %40 = vector.broadcast %cst_31 : f32 to vector<3x16x128xf32>
    %41 = arith.select %39, %40, %37 : vector<3x16x128xi1>, vector<3x16x128xf32>
    %cst_32 = arith.constant 1.000000e+00 : f32
    %42 = vector.broadcast %cst_32 : f32 to vector<1x16x128xf32>
    %43 = arith.subf %42, %3 : vector<1x16x128xf32>
    %44 = vector.broadcast %43 : vector<1x16x128xf32> to vector<3x16x128xf32>
    %45 = arith.mulf %41, %44 : vector<3x16x128xf32>
    %46 = arith.addf %5, %45 : vector<3x16x128xf32>
    %c0_33 = arith.constant 0 : index
    %c0_34 = arith.constant 0 : index
    %c0_35 = arith.constant 0 : index
    %c0_36 = arith.constant 0 : index
    %47 = vector.load %arg3[%c0_33, %c0_34, %c0_35, %c0_36] : memref<1x3x16x128xf32, #tpu.memory_space<vmem>>, vector<1x3x16x128xf32>
    %48 = vector.shape_cast %47 : vector<1x3x16x128xf32> to vector<3x16x128xf32>
    %49 = vector.shape_cast %46 : vector<3x16x128xf32> to vector<1x3x16x128xf32>
    tpu.vector_store %arg3[%c0_33, %c0_34, %c0_35, %c0_36], %49 {strides = array<i32>} : memref<1x3x16x128xf32, #tpu.memory_space<vmem>>, vector<1x3x16x128xf32>,
    %cst_37 = arith.constant 0.000000e+00 : f32
    %cst_38 = arith.constant 1.000000e+00 : f32
    %50 = vector.broadcast %cst_37 : f32 to vector<1x16x128xf32>
    %51 = vector.broadcast %cst_38 : f32 to vector<1x16x128xf32>
    %52 = arith.select %30, %50, %51 : vector<1x16x128xi1>, vector<1x16x128xf32>
    %c0_39 = arith.constant 0 : index
    %c0_40 = arith.constant 0 : index
    %c0_41 = arith.constant 0 : index
    %c0_42 = arith.constant 0 : index
    %53 = vector.load %arg4[%c0_39, %c0_40, %c0_41, %c0_42] : memref<1x1x16x128xf32, #tpu.memory_space<vmem>>, vector<1x1x16x128xf32>
    %54 = vector.shape_cast %53 : vector<1x1x16x128xf32> to vector<1x16x128xf32>
    %55 = vector.shape_cast %52 : vector<1x16x128xf32> to vector<1x1x16x128xf32>
    tpu.vector_store %arg4[%c0_39, %c0_40, %c0_41, %c0_42], %55 {strides = array<i32>} : memref<1x1x16x128xf32, #tpu.memory_space<vmem>>, vector<1x1x16x128xf32>,
    return
  }
  func.func @transform_0(%arg0: i32) -> (i32, i32, i32, i32) {
    %c0_i32 = arith.constant 0 : i32
    %c0_i32_0 = arith.constant 0 : i32
    %c0_i32_1 = arith.constant 0 : i32
    %c0_i32_2 = arith.constant 0 : i32
    return %arg0, %c0_i32, %c0_i32_0, %c0_i32_1 : i32, i32, i32, i32
  }
  func.func @transform_1(%arg0: i32) -> (i32, i32, i32, i32) {
    %c0_i32 = arith.constant 0 : i32
    %c0_i32_0 = arith.constant 0 : i32
    %c0_i32_1 = arith.constant 0 : i32
    %c0_i32_2 = arith.constant 0 : i32
    return %arg0, %c0_i32, %c0_i32_0, %c0_i32_1 : i32, i32, i32, i32
  }
  func.func @transform_2(%arg0: i32) -> (i32, i32, i32, i32) {
    %c0_i32 = arith.constant 0 : i32
    %c0_i32_0 = arith.constant 0 : i32
    %c0_i32_1 = arith.constant 0 : i32
    %c0_i32_2 = arith.constant 0 : i32
    return %arg0, %c0_i32, %c0_i32_0, %c0_i32_1 : i32, i32, i32, i32
  }
  func.func @transform_3(%arg0: i32) -> (i32, i32, i32, i32) {
    %c0_i32 = arith.constant 0 : i32
    %c0_i32_0 = arith.constant 0 : i32
    %c0_i32_1 = arith.constant 0 : i32
    %c0_i32_2 = arith.constant 0 : i32
    return %arg0, %c0_i32, %c0_i32_0, %c0_i32_1 : i32, i32, i32, i32
  }
}

</mosaic_0001>

<llo_original>
// kernel: tpu_custom_call.1
$region0: #{tpu_custom_call.1}
  #allocation0 [shape = 'u32[]', space=smem, size = 0x4, offset = 0x4, fixed_abs, tag = 'smem constant byte address 0x4 - core index']
  #allocation1 [shape = 'u32[144,128]{1,0:T(1,128)}', space=vmem, size = 0x12000, scoped, tag = 'internal scratch']
  #allocation2 [shape = 'f32[4,16,130]{2,1,0:T(8,128)}', space=vmem, size = 0x10000, scoped, tag = 'scratch operand']
  #allocation3 [shape = 'f32[4,18,128]{2,1,0:T(8,128)}', space=vmem, size = 0xc000, scoped, tag = 'scratch operand']
  %s0 = inlined_call_operand.hbm [shape: f32[2,3,16,128], index: 0, kind: input, shape index: {}]
  %s1 = inlined_call_operand.hbm [shape: f32[2,1,16,128], index: 1, kind: input, shape index: {}]
  %s2 = inlined_call_operand.hbm [shape: f32[2,3,16,128], index: 2, kind: output, shape index: {0}]
  %s3 = inlined_call_operand.hbm [shape: f32[2,1,16,128], index: 3, kind: output, shape index: {1}]
  %4 = xla_tuple %s2, %s3
  %s5 = sld [smem:[#allocation0]]
  $region57: #{tpu_custom_call.1} parent=0
    _
  %s7 = ssub.s32 1, %s5
  %s8 = scalar_select 0, %s7, %s5
  $region1: #{tpu_custom_call.1} parent=0
    #allocation4 [shape = 'u8[49152]{0}', space=vmem, size = 0xc000, scoped, tag = 'input window, operand 0']
    #allocation5 [shape = 's32[2]{0}', space=sflag, size = 0x8, scoped, tag = 'scoped memory for tpu_custom_call.1']
    #allocation6 [shape = 's32[2]{0}', space=sflag, size = 0x8, scoped, tag = 'scoped memory for tpu_custom_call.1']
    #allocation7 [shape = 'u8[16384]{0}', space=vmem, size = 0x4000, scoped, tag = 'input window, operand 1']
    #allocation8 [shape = 's32[2]{0}', space=sflag, size = 0x8, scoped, tag = 'scoped memory for tpu_custom_call.1']
    #allocation9 [shape = 'u8[49152]{0}', space=vmem, size = 0xc000, scoped, tag = 'output window, operand 0']
    #allocation10 [shape = 'u8[16384]{0}', space=vmem, size = 0x4000, scoped, tag = 'output window, operand 1']
    #allocation11 [shape = 's32[2]{0}', space=sflag, size = 0x8, scoped, tag = 'scoped memory for tpu_custom_call.1']
    %9 = vsyncpa [#allocation5], 0
    %s10 = scalar_lea.sflag [#allocation5], 1
    %11 = vsyncpa %s10, 0
    %12 = vsyncpa [#allocation8], 0
    %s13 = scalar_lea.sflag [#allocation8], 1
    %14 = vsyncpa %s13, 0
    %15 = vsyncpa [#allocation6], 0
    %s16 = scalar_lea.sflag [#allocation6], 1
    %17 = vsyncpa %s16, 0
    %18 = vsyncpa [#allocation11], 0
    %s19 = scalar_lea.sflag [#allocation11], 1
    %20 = vsyncpa %s19, 0
    loop: start=0, step=1, limit=4
    $region2: #{tpu_custom_call.1} parent=1 // loop_pre_header
      _
    $region3: #{tpu_custom_call.1} parent=1 // loop_header
      %s22 = sphi 0, %s26
      %p23 = scmp.ge.s32.totalorder %s22, 4
      %s32 = sphi 0, %s34
      %s35 = sphi 0, %s32
      %s36 = sphi 0, %s35
      %s52 = sphi 0, %s36
      %s58 = sphi 0, %s60
      %s61 = sphi 0, %s58
      %s62 = sphi 0, %s61
      %s78 = sphi 0, %s62
      %s84 = sphi 0, %s86
      %s87 = sphi 0, %s84
      %s88 = sphi 0, %s87
      %s104 = sphi 0, %s88
      %s110 = sphi 0, %s112
      %s113 = sphi 0, %s110
      %s114 = sphi 0, %s113
      %s130 = sphi 0, %s114
    $region4: #{tpu_custom_call.1} parent=1 // loop_header_branch
      %25 = sbr.rel (%p23) target = $region8
    $region5: #{tpu_custom_call.1} parent=1 // loop_body
      %s27 = ssub.s32 %s22, 1
      %s28 = ssub.s32 %s22, 2
      %s29 = sadd.s32 %s22, 1
      %s30 = ssub.s32 %s22, %s29
      %p31 = scmp.eq.s32.totalorder %s30, 0
      %s33 = sadd.s32 %s32, 1
      %s34 = scalar_select %p31, %s32, %s33
      %p37 = pneg %p31
      %p38 = scmp.eq.s32.totalorder %s22, 1
      %p39 = por %p37, %p38
      %p40 = scmp.ne.s32.totalorder %s32, %s35
      %p41 = scmp.eq.s32.totalorder %s22, 0
      %p42 = por %p40, %p41
      %p43 = scmp.ne.s32.totalorder %s32, %s35
      %p44 = scmp.eq.s32.totalorder %s27, 1
      %p45 = por %p43, %p44
      %p46 = scmp.ne.s32.totalorder %s35, %s36
      %p47 = scmp.eq.s32.totalorder %s27, 0
      %p48 = por %p46, %p47
      %p49 = scmp.ne.s32.totalorder %s35, %s36
      %p50 = scmp.eq.s32.totalorder %s28, 1
      %p51 = por %p49, %p50
      %p53 = scmp.ne.s32.totalorder %s36, %s52
      %p54 = scmp.eq.s32.totalorder %s28, 0
      %p55 = por %p53, %p54
      %s56 = ssub.s32 %s22, %s29
      %p57 = scmp.eq.s32.totalorder %s56, 0
      %s59 = sadd.s32 %s58, 1
      %s60 = scalar_select %p57, %s58, %s59
      %p63 = pneg %p57
      %p64 = scmp.eq.s32.totalorder %s22, 1
      %p65 = por %p63, %p64
      %p66 = scmp.ne.s32.totalorder %s58, %s61
      %p67 = scmp.eq.s32.totalorder %s22, 0
      %p68 = por %p66, %p67
      %p69 = scmp.ne.s32.totalorder %s58, %s61
      %p70 = scmp.eq.s32.totalorder %s27, 1
      %p71 = por %p69, %p70
      %p72 = scmp.ne.s32.totalorder %s61, %s62
      %p73 = scmp.eq.s32.totalorder %s27, 0
      %p74 = por %p72, %p73
      %p75 = scmp.ne.s32.totalorder %s61, %s62
      %p76 = scmp.eq.s32.totalorder %s28, 1
      %p77 = por %p75, %p76
      %p79 = scmp.ne.s32.totalorder %s62, %s78
      %p80 = scmp.eq.s32.totalorder %s28, 0
      %p81 = por %p79, %p80
      %s82 = ssub.s32 %s22, %s29
      %p83 = scmp.eq.s32.totalorder %s82, 0
      %s85 = sadd.s32 %s84, 1
      %s86 = scalar_select %p83, %s84, %s85
      %p89 = pneg %p83
      %p90 = scmp.eq.s32.totalorder %s22, 1
      %p91 = por %p89, %p90
      %p92 = scmp.ne.s32.totalorder %s84, %s87
      %p93 = scmp.eq.s32.totalorder %s22, 0
      %p94 = por %p92, %p93
      %p95 = scmp.ne.s32.totalorder %s84, %s87
      %p96 = scmp.eq.s32.totalorder %s27, 1
      %p97 = por %p95, %p96
      %p98 = scmp.ne.s32.totalorder %s87, %s88
      %p99 = scmp.eq.s32.totalorder %s27, 0
      %p100 = por %p98, %p99
      %p101 = scmp.ne.s32.totalorder %s87, %s88
      %p102 = scmp.eq.s32.totalorder %s28, 1
      %p103 = por %p101, %p102
      %p105 = scmp.ne.s32.totalorder %s88, %s104
      %p106 = scmp.eq.s32.totalorder %s28, 0
      %p107 = por %p105, %p106
      %s108 = ssub.s32 %s22, %s29
      %p109 = scmp.eq.s32.totalorder %s108, 0
      %s111 = sadd.s32 %s110, 1
      %s112 = scalar_select %p109, %s110, %s111
      %p115 = pneg %p109
      %p116 = scmp.eq.s32.totalorder %s22, 1
      %p117 = por %p115, %p116
      %p118 = scmp.ne.s32.totalorder %s110, %s113
      %p119 = scmp.eq.s32.totalorder %s22, 0
      %p120 = por %p118, %p119
      %p121 = scmp.ne.s32.totalorder %s110, %s113
      %p122 = scmp.eq.s32.totalorder %s27, 1
      %p123 = por %p121, %p122
      %p124 = scmp.ne.s32.totalorder %s113, %s114
      %p125 = scmp.eq.s32.totalorder %s27, 0
      %p126 = por %p124, %p125
      %p127 = scmp.ne.s32.totalorder %s113, %s114
      %p128 = scmp.eq.s32.totalorder %s28, 1
      %p129 = por %p127, %p128
      %p131 = scmp.ne.s32.totalorder %s114, %s130
      %p132 = scmp.eq.s32.totalorder %s28, 0
      %p133 = por %p131, %p132
      %p134 = scmp.le.s32.totalorder 1, %s22
      %p135 = scmp.lt.s32.totalorder %s22, 3
      %p136 = pnand %p134, %p135
      %p137 = pneg %p136
      // Predicated region
      $region9: #{tpu_custom_call.1} parent=5 // pred_check
        _
      $region10: #{tpu_custom_call.1} parent=5 // pred_check_branch
        %139 = sbr.rel (%p136) target = $region12
      $region11: #{tpu_custom_call.1} parent=5 // pred_region
        %s140 = ssub.s32 %s22, 1
      $region12: #{tpu_custom_call.1} parent=5 // pred_fallthru
        _
      %p141 = scmp.lt.s32.totalorder %s22, 2
      // Predicated region
      $region13: #{tpu_custom_call.1} parent=5 // pred_check
        %p142 = pneg %p141
      $region14: #{tpu_custom_call.1} parent=5 // pred_check_branch
        %144 = sbr.rel (%p142) target = $region16
      $region15: #{tpu_custom_call.1} parent=5 // pred_region
        // Predicated region
        $region17: #{tpu_custom_call.1} parent=15 // pred_check
          %p145 = pneg %p42
        $region18: #{tpu_custom_call.1} parent=15 // pred_check_branch
          %147 = sbr.rel (%p145) target = $region20
        $region19: #{tpu_custom_call.1} parent=15 // pred_region
          %s148 = sand.u32 %s32, 1
          %s149 = scalar_lea.sflag [#allocation5], %s148
          %s150 = sand.u32 %s32, 1
          %s151 = smul.addr %s150, 48
          %s152 = scalar_lea.vmem [#allocation4], %s151
          %s154 = ssub.s32 768, 768
          %155 = vsyncadd %s149, %s154
          %s156 = smul.addr %s22, 6
          %s157 = smul.addr %s156, 128
          %s158 = scalar_lea.hbm %s0, %s157
          %s159 = sshll.u32 %s152, 4
          %s160 = int_to_ptr.vmem [resolvable:$true] %s159
          %165 = dma.hbm_to_vmem [thread:$0]  %s158, 768, %s160, %s149, 128, 128, 8
        $region20: #{tpu_custom_call.1} parent=15 // pred_fallthru
          _
        // Predicated region
        $region21: #{tpu_custom_call.1} parent=15 // pred_check
          %p166 = pneg %p68
        $region22: #{tpu_custom_call.1} parent=15 // pred_check_branch
          %168 = sbr.rel (%p166) target = $region24
        $region23: #{tpu_custom_call.1} parent=15 // pred_region
          %s169 = sand.u32 %s58, 1
          %s170 = scalar_lea.sflag [#allocation8], %s169
          %s171 = sand.u32 %s58, 1
          %s172 = smul.addr %s171, 16
          %s173 = scalar_lea.vmem [#allocation7], %s172
          %s175 = ssub.s32 256, 256
          %176 = vsyncadd %s170, %s175
          %s177 = smul.addr %s22, 2
          %s178 = smul.addr %s177, 128
          %s179 = scalar_lea.hbm %s1, %s178
          %s180 = sshll.u32 %s173, 4
          %s181 = int_to_ptr.vmem [resolvable:$true] %s180
          %186 = dma.hbm_to_vmem [thread:$0]  %s179, 256, %s181, %s170, 128, 128, 8
        $region24: #{tpu_custom_call.1} parent=15 // pred_fallthru
          _
      $region16: #{tpu_custom_call.1} parent=5 // pred_fallthru
        _
      %p187 = scmp.le.s32.totalorder 1, %s22
      %p188 = scmp.lt.s32.totalorder %s22, 3
      %p189 = pnand %p187, %p188
      %p190 = pneg %p189
      // Predicated region
      $region25: #{tpu_custom_call.1} parent=5 // pred_check
        _
      $region26: #{tpu_custom_call.1} parent=5 // pred_check_branch
        %192 = sbr.rel (%p189) target = $region28
      $region27: #{tpu_custom_call.1} parent=5 // pred_region
        %s193 = ssub.s32 %s22, 1
        %s194 = sand.u32 %s35, 1
        %s195 = scalar_lea.sflag [#allocation5], %s194
        %s196 = sand.u32 %s35, 1
        %s197 = smul.addr %s196, 48
        %s198 = scalar_lea.vmem [#allocation4], %s197
        // Predicated region
        $region29: #{tpu_custom_call.1} parent=27 // pred_check
          %p199 = pneg %p48
        $region30: #{tpu_custom_call.1} parent=27 // pred_check_branch
          %201 = sbr.rel (%p199) target = $region32
        $region31: #{tpu_custom_call.1} parent=27 // pred_region
          %202 = dma.done %s195, 768
        $region32: #{tpu_custom_call.1} parent=27 // pred_fallthru
          _
        %s203 = sand.u32 %s61, 1
        %s204 = scalar_lea.sflag [#allocation8], %s203
        %s205 = sand.u32 %s61, 1
        %s206 = smul.addr %s205, 16
        %s207 = scalar_lea.vmem [#allocation7], %s206
        // Predicated region
        $region33: #{tpu_custom_call.1} parent=27 // pred_check
          %p208 = pneg %p74
        $region34: #{tpu_custom_call.1} parent=27 // pred_check_branch
          %210 = sbr.rel (%p208) target = $region36
        $region35: #{tpu_custom_call.1} parent=27 // pred_region
          %211 = dma.done %s204, 256
        $region36: #{tpu_custom_call.1} parent=27 // pred_fallthru
          _
        %s212 = sand.u32 %s35, 1
        %s213 = scalar_lea.sflag [#allocation5], %s212
        %s214 = sand.u32 %s35, 1
        %s215 = smul.addr %s214, 48
        %s216 = scalar_lea.vmem [#allocation4], %s215
        %p217 = pneg %p48
        %p218 = pneg %p45
        %s219 = sand.u32 %s61, 1
        %s220 = scalar_lea.sflag [#allocation8], %s219
        %s221 = sand.u32 %s61, 1
        %s222 = smul.addr %s221, 16
        %s223 = scalar_lea.vmem [#allocation7], %s222
        %p224 = pneg %p74
        %p225 = pneg %p71
        %p226 = pneg %p100
        %p227 = pneg %p97
        %s228 = sand.u32 %s87, 1
        %s229 = scalar_lea.sflag [#allocation6], %s228
        %s230 = sand.u32 %s87, 1
        %s231 = smul.addr %s230, 48
        %s232 = scalar_lea.vmem [#allocation9], %s231
        %p233 = pneg %p126
        %p234 = pneg %p123
        %s235 = sand.u32 %s113, 1
        %s236 = scalar_lea.sflag [#allocation11], %s235
        %s237 = sand.u32 %s113, 1
        %s238 = smul.addr %s237, 16
        %s239 = scalar_lea.vmem [#allocation10], %s238
        %v240 = vld [vmem:[%s198] sm:$0xff]
        %v241 = vld [vmem:[%s198 + $0x8] sm:$0xff]
        %v242 = vld [vmem:[%s198 + $0x10] sm:$0xff]
        %v243 = vld [vmem:[%s198 + $0x18] sm:$0xff]
        %v244 = vld [vmem:[%s198 + $0x20] sm:$0xff]
        %v245 = vld [vmem:[%s198 + $0x28] sm:$0xff]
        %v246 = vld [vmem:[%s207] sm:$0xff]
        %v247 = vld [vmem:[%s207 + $0x8] sm:$0xff]
        %v248 = vmul.f32 %v240, %v246
        %v249 = vmul.f32 %v241, %v247
        %v250 = vmul.f32 %v242, %v246
        %v251 = vmul.f32 %v243, %v247
        %v252 = vmul.f32 %v244, %v246
        %v253 = vmul.f32 %v245, %v247
        %254 = vst [vmem:[#allocation2] sm:$0xff] 0.0
        %vm255 = vcmask 15360
        %256 = vst.msk [vmem:[#allocation2 + $0x8] sm:$0xff] %vm255, 0.0
        %257 = vst [vmem:[#allocation2 + $0x10] sm:$0xff] 0.0
        %258 = vst.msk [vmem:[#allocation2 + $0x18] sm:$0xff] %vm255, 0.0
        %259 = vst [vmem:[#allocation2 + $0x20] sm:$0xff] 0.0
        %260 = vst.msk [vmem:[#allocation2 + $0x28] sm:$0xff] %vm255, 0.0
        %261 = vst [vmem:[#allocation2 + $0x30] sm:$0xff] 0.0
        %262 = vst.msk [vmem:[#allocation2 + $0x38] sm:$0xff] %vm255, 0.0
        %263 = vst [vmem:[#allocation2 + $0x40] sm:$0xff] 0.0
        %264 = vst.msk [vmem:[#allocation2 + $0x48] sm:$0xff] %vm255, 0.0
        %265 = vst [vmem:[#allocation2 + $0x50] sm:$0xff] 0.0
        %266 = vst.msk [vmem:[#allocation2 + $0x58] sm:$0xff] %vm255, 0.0
        %267 = vst [vmem:[#allocation2 + $0x60] sm:$0xff] 0.0
        %268 = vst.msk [vmem:[#allocation2 + $0x68] sm:$0xff] %vm255, 0.0
        %269 = vst [vmem:[#allocation2 + $0x70] sm:$0xff] 0.0
        %270 = vst.msk [vmem:[#allocation2 + $0x78] sm:$0xff] %vm255, 0.0
        %277 = vrot.lane.b32.xlu0 %v248, 1
        %v278 = vpop.permute.xlu0 %277
        %279 = vrot.lane.b32.xlu0 %v249, 1
        %v280 = vpop.permute.xlu0 %279
        %281 = vrot.lane.b32.xlu0 %v250, 1
        %v282 = vpop.permute.xlu0 %281
        %283 = vrot.lane.b32.xlu0 %v251, 1
        %v284 = vpop.permute.xlu0 %283
        %285 = vrot.lane.b32.xlu0 %v252, 1
        %v286 = vpop.permute.xlu0 %285
        %287 = vrot.lane.b32.xlu0 %v253, 1
        %v288 = vpop.permute.xlu0 %287
        %vm295 = vcmask 1047560
        %296 = vst.msk [vmem:[#allocation2] sm:$0xff] %vm295, %v278
        %vm297 = vcmask 7168
        %298 = vst.msk [vmem:[#allocation2 + $0x8] sm:$0xff] %vm297, %v278
        %299 = vst.msk [vmem:[#allocation2 + $0x10] sm:$0xff] %vm295, %v280
        %300 = vst.msk [vmem:[#allocation2 + $0x18] sm:$0xff] %vm297, %v280
        %301 = vst.msk [vmem:[#allocation2 + $0x20] sm:$0xff] %vm295, %v282
        %302 = vst.msk [vmem:[#allocation2 + $0x28] sm:$0xff] %vm297, %v282
        %303 = vst.msk [vmem:[#allocation2 + $0x30] sm:$0xff] %vm295, %v284
        %304 = vst.msk [vmem:[#allocation2 + $0x38] sm:$0xff] %vm297, %v284
        %305 = vst.msk [vmem:[#allocation2 + $0x40] sm:$0xff] %vm295, %v286
        %306 = vst.msk [vmem:[#allocation2 + $0x48] sm:$0xff] %vm297, %v286
        %307 = vst.msk [vmem:[#allocation2 + $0x50] sm:$0xff] %vm295, %v288
        %308 = vst.msk [vmem:[#allocation2 + $0x58] sm:$0xff] %vm297, %v288
        %311 = vrot.lane.b32.xlu0 %v246, 1
        %v312 = vpop.permute.xlu0 %311
        %313 = vrot.lane.b32.xlu0 %v247, 1
        %v314 = vpop.permute.xlu0 %313
        %s317 = scalar_lea.vmem [#allocation2], 96
        %318 = vst.msk [vmem:[%s317] sm:$0xff] %vm295, %v312
        %319 = vst.msk [vmem:[%s317 + $0x8] sm:$0xff] %vm297, %v312
        %320 = vst.msk [vmem:[%s317 + $0x10] sm:$0xff] %vm295, %v314
        %321 = vst.msk [vmem:[%s317 + $0x18] sm:$0xff] %vm297, %v314
        %v322 = vld [vmem:[#allocation2] sm:$0xff]
        %v323 = vld [vmem:[#allocation2 + $0x8] sm:$0xff]
        %v324 = vld [vmem:[#allocation2 + $0x10] sm:$0xff]
        %v325 = vld [vmem:[#allocation2 + $0x18] sm:$0xff]
        %v326 = vld [vmem:[#allocation2 + $0x20] sm:$0xff]
        %v327 = vld [vmem:[#allocation2 + $0x28] sm:$0xff]
        %v328 = vld [vmem:[#allocation2 + $0x30] sm:$0xff]
        %v329 = vld [vmem:[#allocation2 + $0x38] sm:$0xff]
        %v330 = vld [vmem:[#allocation2 + $0x40] sm:$0xff]
        %v331 = vld [vmem:[#allocation2 + $0x48] sm:$0xff]
        %v332 = vld [vmem:[#allocation2 + $0x50] sm:$0xff]
        %v333 = vld [vmem:[#allocation2 + $0x58] sm:$0xff]
        %v334 = vld [vmem:[#allocation2 + $0x60] sm:$0xff]
        %v335 = vld [vmem:[#allocation2 + $0x68] sm:$0xff]
        %v336 = vld [vmem:[#allocation2 + $0x70] sm:$0xff]
        %v337 = vld [vmem:[#allocation2 + $0x78] sm:$0xff]
        %354 = vrot.lane.b32.xlu0 %v322, 127
        %v355 = vpop.permute.xlu0 %354
        %356 = vrot.lane.b32.xlu0 %v323, 127
        %v357 = vpop.permute.xlu0 %356
        %358 = vrot.lane.b32.xlu0 %v324, 127
        %v359 = vpop.permute.xlu0 %358
        %360 = vrot.lane.b32.xlu0 %v325, 127
        %v361 = vpop.permute.xlu0 %360
        %362 = vrot.lane.b32.xlu0 %v326, 127
        %v363 = vpop.permute.xlu0 %362
        %364 = vrot.lane.b32.xlu0 %v327, 127
        %v365 = vpop.permute.xlu0 %364
        %366 = vrot.lane.b32.xlu0 %v328, 127
        %v367 = vpop.permute.xlu0 %366
        %368 = vrot.lane.b32.xlu0 %v329, 127
        %v369 = vpop.permute.xlu0 %368
        %370 = vrot.lane.b32.xlu0 %v330, 127
        %v371 = vpop.permute.xlu0 %370
        %372 = vrot.lane.b32.xlu0 %v331, 127
        %v373 = vpop.permute.xlu0 %372
        %374 = vrot.lane.b32.xlu0 %v332, 127
        %v375 = vpop.permute.xlu0 %374
        %376 = vrot.lane.b32.xlu0 %v333, 127
        %v377 = vpop.permute.xlu0 %376
        %378 = vrot.lane.b32.xlu0 %v334, 127
        %v379 = vpop.permute.xlu0 %378
        %380 = vrot.lane.b32.xlu0 %v335, 127
        %v381 = vpop.permute.xlu0 %380
        %382 = vrot.lane.b32.xlu0 %v336, 127
        %v383 = vpop.permute.xlu0 %382
        %384 = vrot.lane.b32.xlu0 %v337, 127
        %v385 = vpop.permute.xlu0 %384
        %vm386 = vcmask 1039360
        %v387 = vsel %vm386, %v355, %v357
        %v388 = vsel %vm386, %v359, %v361
        %v389 = vsel %vm386, %v363, %v365
        %v390 = vsel %vm386, %v367, %v369
        %v391 = vsel %vm386, %v371, %v373
        %v392 = vsel %vm386, %v375, %v377
        %v393 = vsel %vm386, %v379, %v381
        %v394 = vsel %vm386, %v383, %v385
        %v403 = vadd.f32 %v322, %v387
        %v404 = vadd.f32 %v324, %v388
        %v405 = vadd.f32 %v326, %v389
        %v406 = vadd.f32 %v328, %v390
        %v407 = vadd.f32 %v330, %v391
        %v408 = vadd.f32 %v332, %v392
        %v409 = vadd.f32 %v334, %v393
        %v410 = vadd.f32 %v336, %v394
        %411 = vrot.lane.b32.xlu0 %v322, 126
        %v412 = vpop.permute.xlu0 %411
        %413 = vrot.lane.b32.xlu0 %v323, 126
        %v414 = vpop.permute.xlu0 %413
        %415 = vrot.lane.b32.xlu0 %v324, 126
        %v416 = vpop.permute.xlu0 %415
        %417 = vrot.lane.b32.xlu0 %v325, 126
        %v418 = vpop.permute.xlu0 %417
        %419 = vrot.lane.b32.xlu0 %v326, 126
        %v420 = vpop.permute.xlu0 %419
        %421 = vrot.lane.b32.xlu0 %v327, 126
        %v422 = vpop.permute.xlu0 %421
        %423 = vrot.lane.b32.xlu0 %v328, 126
        %v424 = vpop.permute.xlu0 %423
        %425 = vrot.lane.b32.xlu0 %v329, 126
        %v426 = vpop.permute.xlu0 %425
        %427 = vrot.lane.b32.xlu0 %v330, 126
        %v428 = vpop.permute.xlu0 %427
        %429 = vrot.lane.b32.xlu0 %v331, 126
        %v430 = vpop.permute.xlu0 %429
        %431 = vrot.lane.b32.xlu0 %v332, 126
        %v432 = vpop.permute.xlu0 %431
        %433 = vrot.lane.b32.xlu0 %v333, 126
        %v434 = vpop.permute.xlu0 %433
        %435 = vrot.lane.b32.xlu0 %v334, 126
        %v436 = vpop.permute.xlu0 %435
        %437 = vrot.lane.b32.xlu0 %v335, 126
        %v438 = vpop.permute.xlu0 %437
        %439 = vrot.lane.b32.xlu0 %v336, 126
        %v440 = vpop.permute.xlu0 %439
        %441 = vrot.lane.b32.xlu0 %v337, 126
        %v442 = vpop.permute.xlu0 %441
        %vm443 = vcmask 1031168
        %v444 = vsel %vm443, %v412, %v414
        %v445 = vsel %vm443, %v416, %v418
        %v446 = vsel %vm443, %v420, %v422
        %v447 = vsel %vm443, %v424, %v426
        %v448 = vsel %vm443, %v428, %v430
        %v449 = vsel %vm443, %v432, %v434
        %v450 = vsel %vm443, %v436, %v438
        %v451 = vsel %vm443, %v440, %v442
        %v460 = vadd.f32 %v403, %v444
        %v461 = vadd.f32 %v404, %v445
        %v462 = vadd.f32 %v405, %v446
        %v463 = vadd.f32 %v406, %v447
        %v464 = vadd.f32 %v407, %v448
        %v465 = vadd.f32 %v408, %v449
        %v466 = vadd.f32 %v409, %v450
        %v467 = vadd.f32 %v410, %v451
        %468 = vst [vmem:[#allocation3] sm:$0xff] 0.0
        %469 = vst [vmem:[#allocation3 + $0x8] sm:$0xff] 0.0
        %470 = vst [vmem:[#allocation3 + $0x10] sm:$0x3] 0.0
        %471 = vst [vmem:[#allocation3 + $0x18] sm:$0xff] 0.0
        %472 = vst [vmem:[#allocation3 + $0x20] sm:$0xff] 0.0
        %473 = vst [vmem:[#allocation3 + $0x28] sm:$0x3] 0.0
        %474 = vst [vmem:[#allocation3 + $0x30] sm:$0xff] 0.0
        %475 = vst [vmem:[#allocation3 + $0x38] sm:$0xff] 0.0
        %476 = vst [vmem:[#allocation3 + $0x40] sm:$0x3] 0.0
        %477 = vst [vmem:[#allocation3 + $0x48] sm:$0xff] 0.0
        %478 = vst [vmem:[#allocation3 + $0x50] sm:$0xff] 0.0
        %479 = vst [vmem:[#allocation3 + $0x58] sm:$0x3] 0.0
        %480 = vst [vmem:[#allocation3 + $0x1] sm:$0xff] %v460
        %481 = vst [vmem:[#allocation3 + $0x9] sm:$0xff] %v461
        %482 = vst [vmem:[#allocation3 + $0x19] sm:$0xff] %v462
        %483 = vst [vmem:[#allocation3 + $0x21] sm:$0xff] %v463
        %484 = vst [vmem:[#allocation3 + $0x31] sm:$0xff] %v464
        %485 = vst [vmem:[#allocation3 + $0x39] sm:$0xff] %v465
        %486 = vst [vmem:[#allocation3 + $0x49] sm:$0xff] %v466
        %487 = vst [vmem:[#allocation3 + $0x51] sm:$0xff] %v467
        %v488 = vld [vmem:[#allocation3] sm:$0xff]
        %v489 = vld [vmem:[#allocation3 + $0x8] sm:$0xff]
        %v490 = vld [vmem:[#allocation3 + $0x10] sm:$0x3]
        %v491 = vld [vmem:[#allocation3 + $0x18] sm:$0xff]
        %v492 = vld [vmem:[#allocation3 + $0x20] sm:$0xff]
        %v493 = vld [vmem:[#allocation3 + $0x28] sm:$0x3]
        %v494 = vld [vmem:[#allocation3 + $0x30] sm:$0xff]
        %v495 = vld [vmem:[#allocation3 + $0x38] sm:$0xff]
        %v496 = vld [vmem:[#allocation3 + $0x40] sm:$0x3]
        %v497 = vld [vmem:[#allocation3 + $0x48] sm:$0xff]
        %v498 = vld [vmem:[#allocation3 + $0x50] sm:$0xff]
        %v499 = vld [vmem:[#allocation3 + $0x58] sm:$0x3]
        %vm512 = vcmask 1046528
        %v513 = vrot.slane %v488, 1
        %v514 = vrot.slane %v489, 1
        %v515 = vsel %vm512, %v513, %v514
        %v516 = vrot.slane %v490, 1
        %v517 = vsel %vm512, %v514, %v516
        %v518 = vrot.slane %v491, 1
        %v519 = vrot.slane %v492, 1
        %v520 = vsel %vm512, %v518, %v519
        %v521 = vrot.slane %v493, 1
        %v522 = vsel %vm512, %v519, %v521
        %v523 = vrot.slane %v494, 1
        %v524 = vrot.slane %v495, 1
        %v525 = vsel %vm512, %v523, %v524
        %v526 = vrot.slane %v496, 1
        %v527 = vsel %vm512, %v524, %v526
        %v528 = vrot.slane %v497, 1
        %v529 = vrot.slane %v498, 1
        %v530 = vsel %vm512, %v528, %v529
        %v531 = vrot.slane %v499, 1
        %v532 = vsel %vm512, %v529, %v531
        %v541 = vadd.f32 %v488, %v515
        %v542 = vadd.f32 %v489, %v517
        %v543 = vadd.f32 %v491, %v520
        %v544 = vadd.f32 %v492, %v522
        %v545 = vadd.f32 %v494, %v525
        %v546 = vadd.f32 %v495, %v527
        %v547 = vadd.f32 %v497, %v530
        %v548 = vadd.f32 %v498, %v532
        %vm549 = vcmask 1045504
        %v550 = vrot.slane %v488, 2
        %v551 = vrot.slane %v489, 2
        %v552 = vsel %vm549, %v550, %v551
        %v553 = vrot.slane %v490, 2
        %v554 = vsel %vm549, %v551, %v553
        %v555 = vrot.slane %v491, 2
        %v556 = vrot.slane %v492, 2
        %v557 = vsel %vm549, %v555, %v556
        %v558 = vrot.slane %v493, 2
        %v559 = vsel %vm549, %v556, %v558
        %v560 = vrot.slane %v494, 2
        %v561 = vrot.slane %v495, 2
        %v562 = vsel %vm549, %v560, %v561
        %v563 = vrot.slane %v496, 2
        %v564 = vsel %vm549, %v561, %v563
        %v565 = vrot.slane %v497, 2
        %v566 = vrot.slane %v498, 2
        %v567 = vsel %vm549, %v565, %v566
        %v568 = vrot.slane %v499, 2
        %v569 = vsel %vm549, %v566, %v568
        %v578 = vadd.f32 %v541, %v552
        %v579 = vadd.f32 %v542, %v554
        %v580 = vadd.f32 %v543, %v557
        %v581 = vadd.f32 %v544, %v559
        %v582 = vadd.f32 %v545, %v562
        %v583 = vadd.f32 %v546, %v564
        %v584 = vadd.f32 %v547, %v567
        %v585 = vadd.f32 %v548, %v569
        %v586 = vmul.f32 %v578, 0.11111111
        %v587 = vmul.f32 %v579, 0.11111111
        %v588 = vmul.f32 %v580, 0.11111111
        %v589 = vmul.f32 %v581, 0.11111111
        %v590 = vmul.f32 %v582, 0.11111111
        %v591 = vmul.f32 %v583, 0.11111111
        %vm592 = vcmp.eq.f32.partialorder %v584, 0.0
        %vm593 = vcmp.eq.f32.partialorder %v585, 0.0
        %v594 = vsel %vm592, 1.0, %v584
        %v595 = vsel %vm593, 1.0, %v585
        %v596 = vrcp.pop %v594
        %v597 = vrcp.pop %v595
        %v598 = vmul.f32 %v596, 9.0
        %v599 = vmul.f32 %v597, 9.0
        %v600 = vmul.f32 %v586, %v598
        %v601 = vmul.f32 %v587, %v599
        %v602 = vmul.f32 %v588, %v598
        %v603 = vmul.f32 %v589, %v599
        %v604 = vmul.f32 %v590, %v598
        %v605 = vmul.f32 %v591, %v599
        %v606 = vsel %vm592, 1, 0
        %v607 = vsel %vm593, 1, 0
        %vm608 = vcmp.eq.s32.totalorder %v606, 1
        %vm609 = vcmp.eq.s32.totalorder %v607, 1
        %v610 = vsel %vm608, 0.0, %v600
        %v611 = vsel %vm609, 0.0, %v601
        %v612 = vsel %vm608, 0.0, %v602
        %v613 = vsel %vm609, 0.0, %v603
        %v614 = vsel %vm608, 0.0, %v604
        %v615 = vsel %vm609, 0.0, %v605
        %v616 = vsub.f32 1.0, %v246
        %v617 = vsub.f32 1.0, %v247
        %v618 = vmul.f32 %v610, %v616
        %v619 = vmul.f32 %v611, %v617
        %v620 = vmul.f32 %v612, %v616
        %v621 = vmul.f32 %v613, %v617
        %v622 = vmul.f32 %v614, %v616
        %v623 = vmul.f32 %v615, %v617
        %v624 = vadd.f32 %v248, %v618
        %v625 = vadd.f32 %v249, %v619
        %v626 = vadd.f32 %v250, %v620
        %v627 = vadd.f32 %v251, %v621
        %v628 = vadd.f32 %v252, %v622
        %v629 = vadd.f32 %v253, %v623
        %630 = vst [vmem:[%s232] sm:$0xff] %v624
        %631 = vst [vmem:[%s232 + $0x8] sm:$0xff] %v625
        %632 = vst [vmem:[%s232 + $0x10] sm:$0xff] %v626
        %633 = vst [vmem:[%s232 + $0x18] sm:$0xff] %v627
        %634 = vst [vmem:[%s232 + $0x20] sm:$0xff] %v628
        %635 = vst [vmem:[%s232 + $0x28] sm:$0xff] %v629
        %v636 = vsel %vm592, 0.0, 1.0
        %v637 = vsel %vm593, 0.0, 1.0
        %638 = vst [vmem:[%s239] sm:$0xff] %v636
        %639 = vst [vmem:[%s239 + $0x8] sm:$0xff] %v637
        %s640 = sand.u32 %s87, 1
        %s641 = scalar_lea.sflag [#allocation6], %s640
        %s642 = sand.u32 %s87, 1
        %s643 = smul.addr %s642, 48
        %s644 = scalar_lea.vmem [#allocation9], %s643
        %s645 = sand.u32 %s113, 1
        %s646 = scalar_lea.sflag [#allocation11], %s645
        %s647 = sand.u32 %s113, 1
        %s648 = smul.addr %s647, 16
        %s649 = scalar_lea.vmem [#allocation10], %s648
        // Predicated region
        $region37: #{tpu_custom_call.1} parent=27 // pred_check
          %p650 = pneg %p97
        $region38: #{tpu_custom_call.1} parent=27 // pred_check_branch
          %652 = sbr.rel (%p650) target = $region40
        $region39: #{tpu_custom_call.1} parent=27 // pred_region
          %s654 = ssub.s32 768, 768
          %655 = vsyncadd %s641, %s654
          %s656 = smul.addr %s27, 6
          %s657 = smul.addr %s656, 128
          %s658 = scalar_lea.hbm %s2, %s657
          %s659 = sshll.u32 %s644, 4
          %s660 = int_to_ptr.vmem [resolvable:$true] %s659
          %665 = dma.vmem_to_hbm [thread:$0]  %s660, 768, %s658, %s641, 128, 128, 8
        $region40: #{tpu_custom_call.1} parent=27 // pred_fallthru
          _
        // Predicated region
        $region41: #{tpu_custom_call.1} parent=27 // pred_check
          %p666 = pneg %p123
        $region42: #{tpu_custom_call.1} parent=27 // pred_check_branch
          %668 = sbr.rel (%p666) target = $region44
        $region43: #{tpu_custom_call.1} parent=27 // pred_region
          %s670 = ssub.s32 256, 256
          %671 = vsyncadd %s646, %s670
          %s672 = smul.addr %s27, 2
          %s673 = smul.addr %s672, 128
          %s674 = scalar_lea.hbm %s3, %s673
          %s675 = sshll.u32 %s649, 4
          %s676 = int_to_ptr.vmem [resolvable:$true] %s675
          %681 = dma.vmem_to_hbm [thread:$0]  %s676, 256, %s674, %s646, 128, 128, 8
        $region44: #{tpu_custom_call.1} parent=27 // pred_fallthru
          _
      $region28: #{tpu_custom_call.1} parent=5 // pred_fallthru
        _
      %p682 = scmp.le.s32.totalorder 2, %s22
      // Predicated region
      $region45: #{tpu_custom_call.1} parent=5 // pred_check
        %p683 = pneg %p682
      $region46: #{tpu_custom_call.1} parent=5 // pred_check_branch
        %685 = sbr.rel (%p683) target = $region48
      $region47: #{tpu_custom_call.1} parent=5 // pred_region
        %s686 = ssub.s32 %s22, 2
        // Predicated region
        $region49: #{tpu_custom_call.1} parent=47 // pred_check
          %p687 = pneg %p103
        $region50: #{tpu_custom_call.1} parent=47 // pred_check_branch
          %689 = sbr.rel (%p687) target = $region52
        $region51: #{tpu_custom_call.1} parent=47 // pred_region
          %s690 = sand.u32 %s88, 1
          %s691 = scalar_lea.sflag [#allocation6], %s690
          %s692 = sand.u32 %s88, 1
          %s693 = smul.addr %s692, 48
          %s694 = scalar_lea.vmem [#allocation9], %s693
          %695 = dma.done %s691, 768
        $region52: #{tpu_custom_call.1} parent=47 // pred_fallthru
          _
        // Predicated region
        $region53: #{tpu_custom_call.1} parent=47 // pred_check
          %p696 = pneg %p129
        $region54: #{tpu_custom_call.1} parent=47 // pred_check_branch
          %698 = sbr.rel (%p696) target = $region56
        $region55: #{tpu_custom_call.1} parent=47 // pred_region
          %s699 = sand.u32 %s114, 1
          %s700 = scalar_lea.sflag [#allocation11], %s699
          %s701 = sand.u32 %s114, 1
          %s702 = smul.addr %s701, 16
          %s703 = scalar_lea.vmem [#allocation10], %s702
          %704 = dma.done %s700, 256
        $region56: #{tpu_custom_call.1} parent=47 // pred_fallthru
          _
      $region48: #{tpu_custom_call.1} parent=5 // pred_fallthru
        _
    $region6: #{tpu_custom_call.1} parent=1 // loop_footer
      %s26 = sadd.s32 1, %s22
    $region7: #{tpu_custom_call.1} parent=1 // loop_footer_branch
      %21 = sbr.rel target = $region3
    $region8: #{tpu_custom_call.1} parent=1 // loop_exit
      _
    %705 = vsyncpa [#allocation5], 1
    %s706 = scalar_lea.sflag [#allocation5], 1
    %707 = vsyncpa %s706, 1
    %708 = vsyncpa [#allocation8], 1
    %s709 = scalar_lea.sflag [#allocation8], 1
    %710 = vsyncpa %s709, 1
    %711 = vsyncpa [#allocation6], 1
    %s712 = scalar_lea.sflag [#allocation6], 1
    %713 = vsyncpa %s712, 1
    %714 = vsyncpa [#allocation11], 1
    %s715 = scalar_lea.sflag [#allocation11], 1
    %716 = vsyncpa %s715, 1

</llo_original>
